<compile_context>
chip_gen: v7x
topology: tpu7x:2x2x1
jax: 0.10.0
libtpu: 0.0.40
codegen_flags: <defaults>
</compile_context>

<pallas_src>
import functools

import jax
import jax.numpy as jnp
from jax.experimental import pallas as pl
from jax.experimental.pallas import tpu as pltpu


# ---------------------------------------------------------------------------
# Hardware / sizing helpers
# ---------------------------------------------------------------------------

def _tpu_vmem_info():
    """Return (vmem_capacity, vmem_budget, multicore_chip)."""
    cap = 128 << 20
    try:
        info = pltpu.get_tpu_info()
        cap = int(getattr(info, "vmem_capacity_bytes", cap)) or cap
    except Exception:
        pass
    budget = int(cap * 0.8)            # leave headroom for internal scratch
    # v7x exposes 64 MiB VMEM per TensorCore and has 2 TCs per chip.
    multicore = cap <= (64 << 20)
    return cap, budget, multicore


def _pick_batch_tile(B, block_bytes, weight_bytes, budget, multicore, slack):
    """Largest divisor TB of B whose fused working set fits VMEM and whose
    per-step block lands around a few MiB; keeps >=2 grid steps on v7x."""
    target = 8 << 20
    best = 1
    for tb in range(1, B + 1):
        if B % tb:
            continue
        if multicore and B >= 2 and (B // tb) < 2:
            continue                    # keep both TensorCores busy
        if 4 * tb * block_bytes + 4 * weight_bytes + slack > budget:
            continue
        if tb == 1 or tb * block_bytes <= target:
            best = tb
    return best


def _pick_spatial_tile(HW, C, itemsize, multicore, override=None):
    """Spatial (lane) tile for the fallback kernels: multiple of 128 or HW."""
    if override is not None:
        t = int(override)
        if t >= HW:
            return HW
        return max(128, (t + 127) // 128 * 128)
    target = (3 << 20) if multicore else (6 << 20)   # v7x smaller, v5e/v6e bigger
    if HW <= 128 or HW * C * itemsize <= target:
        return HW
    t = (target // (C * itemsize)) // 128 * 128
    t = max(128, t)
    return HW if t >= HW else int(t)


# ---------------------------------------------------------------------------
# Kernels
# ---------------------------------------------------------------------------

def _se_fused_kernel(x_ref, w1t_ref, w2t_ref, o_ref):
    """Fused pool -> MLP -> scale for a (TB, C, HW) batch tile."""
    # Squeeze: f32 accumulation on the fly, no f32 copy of the tile kept live.
    pooled = jnp.mean(x_ref[...], axis=2, dtype=jnp.float32)          # (TB, C)

    # Excitation: tiny MLP, fully hidden under the HBM stream -> run it at
    # highest precision (removes the loose-tolerance issue on f32 inputs).
    h = jnp.maximum(
        jnp.dot(pooled, w1t_ref[...].astype(jnp.float32),
                preferred_element_type=jnp.float32,
                precision=jax.lax.Precision.HIGHEST), 0.0)            # (TB, Cr)
    g = jax.nn.sigmoid(
        jnp.dot(h, w2t_ref[...].astype(jnp.float32),
                preferred_element_type=jnp.float32,
                precision=jax.lax.Precision.HIGHEST))                 # (TB, C)

    # Scale: cast the gate down so the streaming multiply + store stay narrow.
    o_ref[...] = x_ref[...] * g.astype(o_ref.dtype)[:, :, None]


def _se_pool_gate_kernel(x_ref, w1t_ref, w2t_ref, g_ref, acc_ref, *,
                         hw_total, t_hw, needs_mask):
    """Fallback pass 1: pooled channel sums -> MLP -> gate (B, C, 1)."""
    s = pl.program_id(1)

    @pl.when(s == 0)
    def _init():
        acc_ref[...] = jnp.zeros_like(acc_ref)

    xb = x_ref[...].astype(jnp.float32)                               # (1, C, t_hw)
    if needs_mask:
        lane = jax.lax.broadcasted_iota(jnp.int32, xb.shape, 2) + s * t_hw
        xb = jnp.where(lane < hw_total, xb, 0.0)
    acc_ref[...] += jnp.sum(xb, axis=2)                               # (1, C)

    @pl.when(s == pl.num_programs(1) - 1)
    def _finish():
        pooled = acc_ref[...] * jnp.float32(1.0 / hw_total)           # (1, C)
        h = jnp.maximum(
            jnp.dot(pooled, w1t_ref[...].astype(jnp.float32),
                    preferred_element_type=jnp.float32,
                    precision=jax.lax.Precision.HIGHEST), 0.0)
        g = jax.nn.sigmoid(
            jnp.dot(h, w2t_ref[...].astype(jnp.float32),
                    preferred_element_type=jnp.float32,
                    precision=jax.lax.Precision.HIGHEST))
        g_ref[...] = g[:, :, None]


def _se_scale_kernel(g_ref, x_ref, o_ref):
    """Fallback pass 2: out = x * gate, native (B, C, HW) layout."""
    # g_ref: (1, C, 1) f32; x_ref/o_ref: (1, C, t_hw). Lane broadcast of gate.
    o_ref[...] = x_ref[...] * g_ref[...].astype(o_ref.dtype)


# ---------------------------------------------------------------------------
# Fallback pallas_calls (no wrapper transposes; native layout)
# ---------------------------------------------------------------------------

def _se_gate_pallas(x_k, w1t, w2t, *, vmem_budget, multicore, spatial_tile):
    B, C, HW = x_k.shape
    Cr = w1t.shape[1]
    itemsize = jnp.dtype(x_k.dtype).itemsize
    t_hw = _pick_spatial_tile(HW, C, itemsize, multicore, spatial_tile)
    n_s = pl.cdiv(HW, t_hw)
    kernel = functools.partial(
        _se_pool_gate_kernel, hw_total=HW, t_hw=t_hw,
        needs_mask=(HW % t_hw) != 0)
    w_itemsize = jnp.dtype(w1t.dtype).itemsize
    return pl.pallas_call(
        kernel,
        out_shape=jax.ShapeDtypeStruct((B, C, 1), jnp.float32),
        grid_spec=pltpu.PrefetchScalarGridSpec(
            num_scalar_prefetch=0,
            grid=(B, n_s),
            in_specs=[
                pl.BlockSpec((1, C, t_hw), lambda b, s: (b, 0, s)),
                pl.BlockSpec((C, Cr), lambda b, s: (0, 0)),
                pl.BlockSpec((Cr, C), lambda b, s: (0, 0)),
            ],
            out_specs=pl.BlockSpec((1, C, 1), lambda b, s: (b, 0, 0)),
            scratch_shapes=[pltpu.VMEM((1, C), jnp.float32)],
        ),
        compiler_params=pltpu.CompilerParams(
            dimension_semantics=("parallel", "arbitrary"),
            vmem_limit_bytes=vmem_budget),
        cost_estimate=pl.CostEstimate(
            flops=B * (C * HW + 4 * C * Cr),
            transcendentals=B * C,
            bytes_accessed=B * C * HW * itemsize
            + 2 * C * Cr * w_itemsize + B * C * 4),
    )(x_k, w1t, w2t)


def _se_scale_pallas(x_k, gate, *, vmem_budget, multicore, spatial_tile):
    B, C, HW = x_k.shape
    itemsize = jnp.dtype(x_k.dtype).itemsize
    t_hw = _pick_spatial_tile(HW, C, itemsize, multicore, spatial_tile)
    n_s = pl.cdiv(HW, t_hw)
    return pl.pallas_call(
        _se_scale_kernel,
        out_shape=jax.ShapeDtypeStruct((B, C, HW), x_k.dtype),
        grid_spec=pltpu.PrefetchScalarGridSpec(
            num_scalar_prefetch=0,
            grid=(B, n_s),
            in_specs=[
                pl.BlockSpec((1, C, 1), lambda b, s: (b, 0, 0)),
                pl.BlockSpec((1, C, t_hw), lambda b, s: (b, 0, s)),
            ],
            out_specs=pl.BlockSpec((1, C, t_hw), lambda b, s: (b, 0, s)),
        ),
        compiler_params=pltpu.CompilerParams(
            dimension_semantics=("parallel", "parallel"),
            vmem_limit_bytes=vmem_budget),
        cost_estimate=pl.CostEstimate(
            flops=B * C * HW,
            transcendentals=0,
            bytes_accessed=2 * B * C * HW * itemsize + B * C * 4),
    )(gate, x_k)


# ---------------------------------------------------------------------------
# Public entry point
# ---------------------------------------------------------------------------

def se_module(x, w1, w2, *, force_tiled=False, spatial_tile=None,
              donate_x=False):
    """Squeeze-and-Excitation forward.

    x : (B, C, H, W) NCHW input.
    w1: (C // r, C)  fc1 weight (PyTorch Linear layout, bias-free).
    w2: (C, C // r)  fc2 weight.
    """
    B, C, H, W = x.shape
    HW = H * W
    Cr = w1.shape[0]
    assert w1.shape == (Cr, C) and w2.shape == (C, Cr)

    w1t = jnp.transpose(w1)           # (C, Cr) — tiny, negligible
    w2t = jnp.transpose(w2)           # (Cr, C)

    x_k = x.reshape(B, C, HW)         # pure reshape, no data movement

    x_itemsize = jnp.dtype(x.dtype).itemsize
    w_itemsize = jnp.dtype(w1.dtype).itemsize
    block_bytes = C * HW * x_itemsize
    weight_bytes = 2 * C * Cr * w_itemsize
    slack = 2 << 20

    vmem_cap, vmem_budget, multicore = _tpu_vmem_info()

    fits_fused = (4 * block_bytes + 4 * weight_bytes + slack) <= vmem_budget
    use_tiled = force_tiled or (not fits_fused) or (multicore and B < 2)

    if use_tiled:
        # Two-kernel fallback: pool+gate (1 read of x) then scale
        # (1 read + 1 write of x), all Pallas, all native layout.
        gate = _se_gate_pallas(x_k, w1t, w2t, vmem_budget=vmem_budget,
                               multicore=multicore, spatial_tile=spatial_tile)
        out = _se_scale_pallas(x_k, gate, vmem_budget=vmem_budget,
                               multicore=multicore, spatial_tile=spatial_tile)
        return out.reshape(B, C, H, W)

    tb = _pick_batch_tile(B, block_bytes, weight_bytes, vmem_budget,
                          multicore, slack)
    n_b = B // tb

    out = pl.pallas_call(
        _se_fused_kernel,
        out_shape=jax.ShapeDtypeStruct((B, C, HW), x.dtype),
        grid_spec=pltpu.PrefetchScalarGridSpec(
            num_scalar_prefetch=0,
            grid=(n_b,),
            in_specs=[
                pl.BlockSpec((tb, C, HW), lambda b: (b, 0, 0)),
                pl.BlockSpec((C, Cr), lambda b: (0, 0)),
                pl.BlockSpec((Cr, C), lambda b: (0, 0)),
            ],
            out_specs=pl.BlockSpec((tb, C, HW), lambda b: (b, 0, 0)),
        ),
        compiler_params=pltpu.CompilerParams(
            dimension_semantics=("parallel",),
            vmem_limit_bytes=vmem_budget),
        cost_estimate=pl.CostEstimate(
            flops=B * (2 * C * HW + 4 * C * Cr),
            transcendentals=B * C,
            bytes_accessed=2 * B * C * HW * x_itemsize + 2 * weight_bytes),
        input_output_aliases=({0: 0} if donate_x else {}),
    )(x_k, w1t, w2t)
    return out.reshape(B, C, H, W)


# ---------------------------------------------------------------------------
# Reference + tests
# ---------------------------------------------------------------------------

def _reference(x, w1, w2):
    y = jnp.mean(x.astype(jnp.float32), axis=(2, 3))                  # (B, C)
    h = jnp.maximum(jnp.dot(y, w1.T.astype(jnp.float32),
                            precision=jax.lax.Precision.HIGHEST), 0.0)
    g = jax.nn.sigmoid(jnp.dot(h, w2.T.astype(jnp.float32),
                               precision=jax.lax.Precision.HIGHEST))
    return (x.astype(jnp.float32) * g[:, :, None, None]).astype(x.dtype)


if __name__ == "__main__":
    root = jax.random.PRNGKey(0)

    def run_case(idx, B, C, H, W, reduction=4, dtype=jnp.float32,
                 atol=1e-5, rtol=1e-5, **kw):
        Cr = max(1, C // reduction)
        kx, k1, k2 = jax.random.split(jax.random.fold_in(root, idx), 3)
        x = jax.random.normal(kx, (B, C, H, W), dtype=jnp.float32).astype(dtype)
        # PyTorch Linear layout: (out_features, in_features), bias-free.
        w1 = (jax.random.normal(k1, (Cr, C), dtype=jnp.float32) * 0.5).astype(dtype)
        w2 = (jax.random.normal(k2, (C, Cr), dtype=jnp.float32) * 0.5).astype(dtype)
        out = se_module(x, w1, w2, **kw)
        jax.block_until_ready(out)
        ref = _reference(x, w1, w2)
        assert out.shape == x.shape and out.dtype == x.dtype
        assert jnp.allclose(out.astype(jnp.float32), ref.astype(jnp.float32),
                            atol=atol, rtol=rtol), (idx, B, C, H, W)

    # 0: fused path, lane-aligned spatial (HW = 256).
    run_case(0, 2, 4, 16, 16)
    # 1: fused path, non-lane-aligned spatial (HW = 49) kept in native layout
    #    (no wrapper transpose); tight tolerance thanks to HIGHEST-precision MLP.
    run_case(1, 2, 128, 7, 7, atol=1e-4, rtol=1e-4)
    # 2: tiled fallback (Pallas pool+gate + Pallas scale), evenly dividing tile.
    run_case(2, 2, 4, 16, 16, force_tiled=True, spatial_tile=128)
    # 3: tiled fallback with a partial spatial tail (HW = 169, tile = 128):
    #    exercises the masked pool accumulation and masked output stores.
    run_case(3, 2, 8, 13, 13, force_tiled=True, spatial_tile=128)
    # 4: fused path, bf16 I/O (gate cast down before the streaming multiply).
    run_case(4, 2, 4, 16, 16, dtype=jnp.bfloat16, atol=2e-2, rtol=2e-2)

    print("KERNEL_OK")
</pallas_src>

<mosaic_0001>
module attributes {stable_mosaic.version = 11 : i64} {
  func.func @_se_fused_kernel(%arg0: i32, %arg1: memref<2x4x256xf32, #tpu.memory_space<vmem>>, %arg2: memref<4x1xf32, #tpu.memory_space<vmem>>, %arg3: memref<1x4xf32, #tpu.memory_space<vmem>>, %arg4: memref<2x4x256xf32, #tpu.memory_space<vmem>>) attributes {dimension_semantics = [#tpu.dimension_semantics<parallel>], iteration_bounds = array<i64: 1>, scalar_prefetch = 0 : i64, scratch_operands = 0 : i64, tpu.core_type = #tpu.core_type<tc>, window_params = [{transform_indices = @transform_0, window_bounds = array<i64: 2, 4, 256>}, {pipeline_mode = #tpu.pipeline_mode<synchronous>, transform_indices = @transform_1, window_bounds = array<i64: 4, 1>}, {pipeline_mode = #tpu.pipeline_mode<synchronous>, transform_indices = @transform_2, window_bounds = array<i64: 1, 4>}, {transform_indices = @transform_3, window_bounds = array<i64: 2, 4, 256>}]} {
    %c0 = arith.constant 0 : index
    %c0_0 = arith.constant 0 : index
    %c0_1 = arith.constant 0 : index
    %0 = vector.load %arg1[%c0, %c0_0, %c0_1] : memref<2x4x256xf32, #tpu.memory_space<vmem>>, vector<2x4x256xf32>
    %cst = arith.constant dense<0.000000e+00> : vector<2x4xf32>
    %1 = vector.multi_reduction <add>, %0, %cst [2] : vector<2x4x256xf32> to vector<2x4xf32>
    %cst_2 = arith.constant 2.560000e+02 : f32
    %2 = vector.broadcast %cst_2 : f32 to vector<2x4xf32>
    %3 = arith.divf %1, %2 : vector<2x4xf32>
    %c0_3 = arith.constant 0 : index
    %c0_4 = arith.constant 0 : index
    %4 = vector.load %arg2[%c0_3, %c0_4] : memref<4x1xf32, #tpu.memory_space<vmem>>, vector<4x1xf32>
    %cst_5 = arith.constant dense<0.000000e+00> : vector<2x1xf32>
    %5 = tpu.matmul %3, %4, %cst_5 {dimension_numbers = #tpu.dot_dimension_numbers<[1], [0], [0], [1], [0, 0, 1, 1], [], []>, precision = #tpu.contract_precision<fp32>} : vector<2x4xf32>, vector<4x1xf32>, vector<2x1xf32> -> vector<2x1xf32>
    %cst_6 = arith.constant 0.000000e+00 : f32
    %6 = vector.broadcast %cst_6 : f32 to vector<2x1xf32>
    %7 = arith.maximumf %5, %6 : vector<2x1xf32>
    %c0_7 = arith.constant 0 : index
    %c0_8 = arith.constant 0 : index
    %8 = vector.load %arg3[%c0_7, %c0_8] : memref<1x4xf32, #tpu.memory_space<vmem>>, vector<1x4xf32>
    %cst_9 = arith.constant dense<0.000000e+00> : vector<2x4xf32>
    %9 = tpu.matmul %7, %8, %cst_9 {dimension_numbers = #tpu.dot_dimension_numbers<[1], [0], [0], [1], [0, 0, 1, 1], [], []>, precision = #tpu.contract_precision<fp32>} : vector<2x1xf32>, vector<1x4xf32>, vector<2x4xf32> -> vector<2x4xf32>
    %10 = arith.negf %9 : vector<2x4xf32>
    %11 = math.exp %10 : vector<2x4xf32>
    %cst_10 = arith.constant 1.000000e+00 : f32
    %12 = vector.broadcast %cst_10 : f32 to vector<2x4xf32>
    %13 = arith.addf %12, %11 : vector<2x4xf32>
    %14 = arith.divf %12, %13 : vector<2x4xf32>
    %c0_11 = arith.constant 0 : index
    %c0_12 = arith.constant 0 : index
    %c0_13 = arith.constant 0 : index
    %15 = vector.load %arg1[%c0_11, %c0_12, %c0_13] : memref<2x4x256xf32, #tpu.memory_space<vmem>>, vector<2x4x256xf32>
    %16 = vector.shape_cast %14 : vector<2x4xf32> to vector<2x4x1xf32>
    %17 = vector.broadcast %16 : vector<2x4x1xf32> to vector<2x4x256xf32>
    %18 = arith.mulf %15, %17 : vector<2x4x256xf32>
    %c0_14 = arith.constant 0 : index
    %c0_15 = arith.constant 0 : index
    %c0_16 = arith.constant 0 : index
    %19 = vector.load %arg4[%c0_14, %c0_15, %c0_16] : memref<2x4x256xf32, #tpu.memory_space<vmem>>, vector<2x4x256xf32>
    tpu.vector_store %arg4[%c0_14, %c0_15, %c0_16], %18 {strides = array<i32>} : memref<2x4x256xf32, #tpu.memory_space<vmem>>, vector<2x4x256xf32>,
    return
  }
  func.func @transform_0(%arg0: i32) -> (i32, i32, i32) {
    %c0_i32 = arith.constant 0 : i32
    %c0_i32_0 = arith.constant 0 : i32
    %c0_i32_1 = arith.constant 0 : i32
    return %arg0, %c0_i32, %c0_i32_0 : i32, i32, i32
  }
  func.func @transform_1(%arg0: i32) -> (i32, i32) {
    %c0_i32 = arith.constant 0 : i32
    %c0_i32_0 = arith.constant 0 : i32
    %c0_i32_1 = arith.constant 0 : i32
    return %c0_i32, %c0_i32_0 : i32, i32
  }
  func.func @transform_2(%arg0: i32) -> (i32, i32) {
    %c0_i32 = arith.constant 0 : i32
    %c0_i32_0 = arith.constant 0 : i32
    %c0_i32_1 = arith.constant 0 : i32
    return %c0_i32, %c0_i32_0 : i32, i32
  }
  func.func @transform_3(%arg0: i32) -> (i32, i32, i32) {
    %c0_i32 = arith.constant 0 : i32
    %c0_i32_0 = arith.constant 0 : i32
    %c0_i32_1 = arith.constant 0 : i32
    return %arg0, %c0_i32, %c0_i32_0 : i32, i32, i32
  }
}

</mosaic_0001>

<llo_original>
// kernel: tpu_custom_call.1
$region0: #{tpu_custom_call.1}
  #allocation0 [shape = 'u32[]', space=smem, size = 0x4, offset = 0x4, fixed_abs, tag = 'smem constant byte address 0x4 - core index']
  #allocation1 [shape = 'u32[144,128]{1,0:T(1,128)}', space=vmem, size = 0x12000, scoped, tag = 'internal scratch']
  %s0 = inlined_call_operand.hbm [shape: f32[2,4,256], index: 0, kind: input, shape index: {}]
  %s1 = inlined_call_operand.hbm [shape: f32[4,1], index: 1, kind: input, shape index: {}]
  %s2 = inlined_call_operand.hbm [shape: f32[1,4], index: 2, kind: input, shape index: {}]
  %s3 = inlined_call_operand.hbm [shape: f32[2,4,256], index: 3, kind: output, shape index: {}]
  %s4 = sld [smem:[#allocation0]]
  $region34: #{tpu_custom_call.1} parent=0
    _
  %s6 = ssub.s32 1, %s4
  %s7 = scalar_select 0, %s6, %s4
  $region1: #{tpu_custom_call.1} parent=0
    #allocation2 [shape = 'u8[8192]{0}', space=vmem, size = 0x2000, scoped, tag = 'input window, operand 0, single buffered']
    #allocation3 [shape = 's32[1]{0}', space=sflag, size = 0x4, scoped, tag = 'scoped memory for tpu_custom_call.1']
    #allocation4 [shape = 's32[1]{0}', space=sflag, size = 0x4, scoped, tag = 'scoped memory for tpu_custom_call.1']
    #allocation5 [shape = 'u8[2048]{0}', space=vmem, size = 0x800, scoped, tag = 'input window, operand 1, single buffered']
    #allocation6 [shape = 's32[1]{0}', space=sflag, size = 0x4, scoped, tag = 'scoped memory for tpu_custom_call.1']
    #allocation7 [shape = 'u8[512]{0}', space=vmem, size = 0x400, scoped, tag = 'input window, operand 2, single buffered']
    #allocation8 [shape = 'u8[8192]{0}', space=vmem, size = 0x2000, scoped, tag = 'output window, operand 0, single buffered']
    %8 = vsyncpa [#allocation3], 0
    %9 = vsyncpa [#allocation6], 0
    %10 = vsyncpa [#allocation4], 0
    // Predicated region
    $region2: #{tpu_custom_call.1} parent=1 // pred_check
      _
    $region3: #{tpu_custom_call.1} parent=1 // pred_check_branch
      %12 = sbr.rel (0) target = $region5
    $region4: #{tpu_custom_call.1} parent=1 // pred_region
      %s14 = ssub.s32 256, 256
      %15 = vsyncadd [#allocation3], %s14
      %s16 = sshll.u32 [#allocation2], 4
      %s17 = int_to_ptr.vmem [resolvable:$true] %s16
      %22 = dma.hbm_to_vmem [thread:$0]  %s0, 256, %s17, [#allocation3], 128, 128, 8
    $region5: #{tpu_custom_call.1} parent=1 // pred_fallthru
      _
    // Predicated region
    $region6: #{tpu_custom_call.1} parent=1 // pred_check
      _
    $region7: #{tpu_custom_call.1} parent=1 // pred_check_branch
      %24 = sbr.rel (0) target = $region9
    $region8: #{tpu_custom_call.1} parent=1 // pred_region
      %s26 = ssub.s32 64, 64
      %27 = vsyncadd [#allocation6], %s26
      %s29 = sshll.u32 [#allocation5], 4
      %s30 = int_to_ptr.vmem [resolvable:$true] %s29
      %32 = dma.hbm_to_vmem [thread:$0]  %s1, 64, %s30, [#allocation6]
    $region9: #{tpu_custom_call.1} parent=1 // pred_fallthru
      _
    // Predicated region
    $region10: #{tpu_custom_call.1} parent=1 // pred_check
      _
    $region11: #{tpu_custom_call.1} parent=1 // pred_check_branch
      %34 = sbr.rel (0) target = $region13
    $region12: #{tpu_custom_call.1} parent=1 // pred_region
      %s36 = ssub.s32 16, 16
      %37 = vsyncadd [#allocation6], %s36
      %s39 = sshll.u32 [#allocation7], 4
      %s40 = int_to_ptr.vmem [resolvable:$true] %s39
      %42 = dma.hbm_to_vmem [thread:$0]  %s2, 16, %s40, [#allocation6]
    $region13: #{tpu_custom_call.1} parent=1 // pred_fallthru
      _
    // Predicated region
    $region14: #{tpu_custom_call.1} parent=1 // pred_check
      _
    $region15: #{tpu_custom_call.1} parent=1 // pred_check_branch
      %44 = sbr.rel (0) target = $region17
    $region16: #{tpu_custom_call.1} parent=1 // pred_region
      %45 = dma.done [#allocation3], 256
    $region17: #{tpu_custom_call.1} parent=1 // pred_fallthru
      _
    // Predicated region
    $region18: #{tpu_custom_call.1} parent=1 // pred_check
      _
    $region19: #{tpu_custom_call.1} parent=1 // pred_check_branch
      %47 = sbr.rel (0) target = $region21
    $region20: #{tpu_custom_call.1} parent=1 // pred_region
      %48 = dma.done [#allocation6], 64
    $region21: #{tpu_custom_call.1} parent=1 // pred_fallthru
      _
    // Predicated region
    $region22: #{tpu_custom_call.1} parent=1 // pred_check
      _
    $region23: #{tpu_custom_call.1} parent=1 // pred_check_branch
      %50 = sbr.rel (0) target = $region25
    $region24: #{tpu_custom_call.1} parent=1 // pred_region
      %51 = dma.done [#allocation6], 16
    $region25: #{tpu_custom_call.1} parent=1 // pred_fallthru
      _
    %v52 = vld [vmem:[#allocation2] sm:$0xff]
    %v53 = vld [vmem:[#allocation2 + $0x8] sm:$0xff]
    %v56 = vcombine.high %v52, %v52
    %v57 = vcombine.high %v53, %v53
    %vm60 = vcmask 1043456
    %v61 = vsel %vm60, %v52, 0.0
    %v62 = vsel %vm60, %v56, 0.0
    %v63 = vadd.f32 %v61, %v62
    %64 = vadd.xlane.f32.xlu0 %v63
    %v65 = vpop.xlane.xlu0 %64
    %v66 = vsel %vm60, %v53, 0.0
    %v67 = vsel %vm60, %v57, 0.0
    %v68 = vadd.f32 %v66, %v67
    %69 = vadd.xlane.f32.xlu0 %v68
    %v70 = vpop.xlane.xlu0 %69
    %v71 = vrcp.pop 256.0
    %v72 = vmul.f32 %v65, %v71
    %v73 = vmul.f32 %v70, %v71
    %v74 = vld [vmem:[#allocation5] sm:$0xf]
    %v77 = vlaneseq
    %v78 = vand.u32 %v77, 127
    %v79 = vlaneseq
    %v80 = vshrl.u32 %v79, 7
    %v81 = vsub.s32 %v78, %v80
    %v82 = vrot.slane %v72, %v81
    %v83 = vlaneseq
    %v84 = vshrl.u32 %v83, 7
    %v85 = vsub.s32 %v78, %v84
    %v86 = vrot.slane %v73, %v85
    %vm87 = vcmask 1041409
    %v88 = vsel %vm87, %v86, %v82
    %vm89 = vcmask 31744
    %v90 = vsel %vm89, %v88, 0
    %v93 = vsel %vm60, %v74, 0
    %95 = vmatprep.subr.mxu0 0.0
    %v96 = vand.u32 %v93, 4294901760
    %97 = vmatpush1.msra.mxu0 %v96
    %98 = vmatprep.subr.mxu0 0.0
    %99 = vmatpush1.msra.mxu0 0.0
    %100 = vmatprep.subr.mxu0 0.0
    %101 = vmatpush1.msra.mxu0 0.0
    %102 = vmatprep.subr.mxu0 0.0
    %103 = vmatpush1.msra.mxu0 0.0
    %104 = vmatprep.subr.mxu0 0.0
    %105 = vmatpush1.msra.mxu0 0.0
    %106 = vmatprep.subr.mxu0 0.0
    %107 = vmatpush1.msra.mxu0 0.0
    %108 = vmatprep.subr.mxu0 0.0
    %109 = vmatpush1.msra.mxu0 0.0
    %110 = vmatprep.subr.mxu0 0.0
    %111 = vmatpush1.msra.mxu0 0.0
    %112 = vmatprep.subr.mxu0 0.0
    %113 = vmatpush1.msra.mxu0 0.0
    %114 = vmatprep.subr.mxu0 0.0
    %115 = vmatpush1.msra.mxu0 0.0
    %116 = vmatprep.subr.mxu0 0.0
    %117 = vmatpush1.msra.mxu0 0.0
    %118 = vmatprep.subr.mxu0 0.0
    %119 = vmatpush1.msra.mxu0 0.0
    %120 = vmatprep.subr.mxu0 0.0
    %121 = vmatpush1.msra.mxu0 0.0
    %122 = vmatprep.subr.mxu0 0.0
    %123 = vmatpush1.msra.mxu0 0.0
    %124 = vmatprep.subr.mxu0 0.0
    %125 = vmatpush1.msra.mxu0 0.0
    %126 = vmatprep.subr.mxu0 0.0
    %127 = vmatpush1.msra.mxu0 0.0
    %128 = vmatprep.subr.mxu0 0.0
    %129 = vmatpush1.msra.mxu0 0.0
    %130 = vmatprep.subr.mxu0 0.0
    %131 = vmatpush1.msra.mxu0 0.0
    %132 = vmatprep.subr.mxu0 0.0
    %133 = vmatpush1.msra.mxu0 0.0
    %134 = vmatprep.subr.mxu0 0.0
    %135 = vmatpush1.msra.mxu0 0.0
    %136 = vmatprep.subr.mxu0 0.0
    %137 = vmatpush1.msra.mxu0 0.0
    %138 = vmatprep.subr.mxu0 0.0
    %139 = vmatpush1.msra.mxu0 0.0
    %140 = vmatprep.subr.mxu0 0.0
    %141 = vmatpush1.msra.mxu0 0.0
    %142 = vmatprep.subr.mxu0 0.0
    %143 = vmatpush1.msra.mxu0 0.0
    %144 = vmatprep.subr.mxu0 0.0
    %145 = vmatpush1.msra.mxu0 0.0
    %146 = vmatprep.subr.mxu0 0.0
    %147 = vmatpush1.msra.mxu0 0.0
    %148 = vmatprep.subr.mxu0 0.0
    %149 = vmatpush1.msra.mxu0 0.0
    %150 = vmatprep.subr.mxu0 0.0
    %151 = vmatpush1.msra.mxu0 0.0
    %152 = vmatprep.subr.mxu0 0.0
    %153 = vmatpush1.msra.mxu0 0.0
    %154 = vmatprep.subr.mxu0 0.0
    %155 = vmatpush1.msra.mxu0 0.0
    %156 = vmatprep.subr.mxu0 0.0
    %157 = vmatpush1.msra.mxu0 0.0
    %158 = vmatprep.subr.mxu0 0.0
    %159 = vmatpush1.msra.mxu0 0.0
    %160 = vmatprep.mubr.f32.mxu0 0.0
    %v161 = vand.u32 %v90, 4294901760
    %v162 = vsub.f32 %v90, %v161
    %v163 = vand.u32 %v162, 4294901760
    %v164 = vsub.f32 %v162, %v163
    %v165 = vand.u32 %v164, 4294901760
    %166 = vmatmul.mubr.f32.gmra.mrb[0].mxu0 %v165
    %v167 = vpop.f32.mrb[0].mxu0
    %v168 = vadd.f32 0.0, %v167
    %v169 = vpop.f32.mrb[0].mxu0
    %170 = vdwg.mxu0
    %171 = vmatprep.subr.mxu0 0.0
    %v172 = vand.u32 %v93, 4294901760
    %v173 = vsub.f32 %v93, %v172
    %v174 = vand.u32 %v173, 4294901760
    %v175 = vsub.f32 %v173, %v174
    %v176 = vand.u32 %v175, 4294901760
    %177 = vmatpush1.msra.mxu0 %v176
    %178 = vmatprep.subr.mxu0 0.0
    %179 = vmatpush1.msra.mxu0 0.0
    %180 = vmatprep.subr.mxu0 0.0
    %181 = vmatpush1.msra.mxu0 0.0
    %182 = vmatprep.subr.mxu0 0.0
    %183 = vmatpush1.msra.mxu0 0.0
    %184 = vmatprep.subr.mxu0 0.0
    %185 = vmatpush1.msra.mxu0 0.0
    %186 = vmatprep.subr.mxu0 0.0
    %187 = vmatpush1.msra.mxu0 0.0
    %188 = vmatprep.subr.mxu0 0.0
    %189 = vmatpush1.msra.mxu0 0.0
    %190 = vmatprep.subr.mxu0 0.0
    %191 = vmatpush1.msra.mxu0 0.0
    %192 = vmatprep.subr.mxu0 0.0
    %193 = vmatpush1.msra.mxu0 0.0
    %194 = vmatprep.subr.mxu0 0.0
    %195 = vmatpush1.msra.mxu0 0.0
    %196 = vmatprep.subr.mxu0 0.0
    %197 = vmatpush1.msra.mxu0 0.0
    %198 = vmatprep.subr.mxu0 0.0
    %199 = vmatpush1.msra.mxu0 0.0
    %200 = vmatprep.subr.mxu0 0.0
    %201 = vmatpush1.msra.mxu0 0.0
    %202 = vmatprep.subr.mxu0 0.0
    %203 = vmatpush1.msra.mxu0 0.0
    %204 = vmatprep.subr.mxu0 0.0
    %205 = vmatpush1.msra.mxu0 0.0
    %206 = vmatprep.subr.mxu0 0.0
    %207 = vmatpush1.msra.mxu0 0.0
    %208 = vmatprep.subr.mxu0 0.0
    %209 = vmatpush1.msra.mxu0 0.0
    %210 = vmatprep.subr.mxu0 0.0
    %211 = vmatpush1.msra.mxu0 0.0
    %212 = vmatprep.subr.mxu0 0.0
    %213 = vmatpush1.msra.mxu0 0.0
    %214 = vmatprep.subr.mxu0 0.0
    %215 = vmatpush1.msra.mxu0 0.0
    %216 = vmatprep.subr.mxu0 0.0
    %217 = vmatpush1.msra.mxu0 0.0
    %218 = vmatprep.subr.mxu0 0.0
    %219 = vmatpush1.msra.mxu0 0.0
    %220 = vmatprep.subr.mxu0 0.0
    %221 = vmatpush1.msra.mxu0 0.0
    %222 = vmatprep.subr.mxu0 0.0
    %223 = vmatpush1.msra.mxu0 0.0
    %224 = vmatprep.subr.mxu0 0.0
    %225 = vmatpush1.msra.mxu0 0.0
    %226 = vmatprep.subr.mxu0 0.0
    %227 = vmatpush1.msra.mxu0 0.0
    %228 = vmatprep.subr.mxu0 0.0
    %229 = vmatpush1.msra.mxu0 0.0
    %230 = vmatprep.subr.mxu0 0.0
    %231 = vmatpush1.msra.mxu0 0.0
    %232 = vmatprep.subr.mxu0 0.0
    %233 = vmatpush1.msra.mxu0 0.0
    %234 = vmatprep.subr.mxu0 0.0
    %235 = vmatpush1.msra.mxu0 0.0
    %236 = vmatprep.subr.mxu0 0.0
    %237 = vmatpush1.msra.mxu0 0.0
    %238 = vmatprep.subr.mxu0 0.0
    %239 = vmatpush1.msra.mxu0 0.0
    %240 = vmatprep.mubr.f32.mxu0 0.0
    %v241 = vand.u32 %v90, 4294901760
    %242 = vmatmul.mubr.f32.gmra.mrb[0].mxu0 %v241
    %v243 = vpop.f32.mrb[0].mxu0
    %v244 = vadd.f32 %v168, %v243
    %v245 = vpop.f32.mrb[0].mxu0
    %246 = vdwg.mxu0
    %247 = vmatprep.subr.mxu0 0.0
    %v248 = vand.u32 %v93, 4294901760
    %v249 = vsub.f32 %v93, %v248
    %250 = vmatpush1.msra.mxu0 %v249
    %251 = vmatprep.subr.mxu0 0.0
    %252 = vmatpush1.msra.mxu0 0.0
    %253 = vmatprep.subr.mxu0 0.0
    %254 = vmatpush1.msra.mxu0 0.0
    %255 = vmatprep.subr.mxu0 0.0
    %256 = vmatpush1.msra.mxu0 0.0
    %257 = vmatprep.subr.mxu0 0.0
    %258 = vmatpush1.msra.mxu0 0.0
    %259 = vmatprep.subr.mxu0 0.0
    %260 = vmatpush1.msra.mxu0 0.0
    %261 = vmatprep.subr.mxu0 0.0
    %262 = vmatpush1.msra.mxu0 0.0
    %263 = vmatprep.subr.mxu0 0.0
    %264 = vmatpush1.msra.mxu0 0.0
    %265 = vmatprep.subr.mxu0 0.0
    %266 = vmatpush1.msra.mxu0 0.0
    %267 = vmatprep.subr.mxu0 0.0
    %268 = vmatpush1.msra.mxu0 0.0
    %269 = vmatprep.subr.mxu0 0.0
    %270 = vmatpush1.msra.mxu0 0.0
    %271 = vmatprep.subr.mxu0 0.0
    %272 = vmatpush1.msra.mxu0 0.0
    %273 = vmatprep.subr.mxu0 0.0
    %274 = vmatpush1.msra.mxu0 0.0
    %275 = vmatprep.subr.mxu0 0.0
    %276 = vmatpush1.msra.mxu0 0.0
    %277 = vmatprep.subr.mxu0 0.0
    %278 = vmatpush1.msra.mxu0 0.0
    %279 = vmatprep.subr.mxu0 0.0
    %280 = vmatpush1.msra.mxu0 0.0
    %281 = vmatprep.subr.mxu0 0.0
    %282 = vmatpush1.msra.mxu0 0.0
    %283 = vmatprep.subr.mxu0 0.0
    %284 = vmatpush1.msra.mxu0 0.0
    %285 = vmatprep.subr.mxu0 0.0
    %286 = vmatpush1.msra.mxu0 0.0
    %287 = vmatprep.subr.mxu0 0.0
    %288 = vmatpush1.msra.mxu0 0.0
    %289 = vmatprep.subr.mxu0 0.0
    %290 = vmatpush1.msra.mxu0 0.0
    %291 = vmatprep.subr.mxu0 0.0
    %292 = vmatpush1.msra.mxu0 0.0
    %293 = vmatprep.subr.mxu0 0.0
    %294 = vmatpush1.msra.mxu0 0.0
    %295 = vmatprep.subr.mxu0 0.0
    %296 = vmatpush1.msra.mxu0 0.0
    %297 = vmatprep.subr.mxu0 0.0
    %298 = vmatpush1.msra.mxu0 0.0
    %299 = vmatprep.subr.mxu0 0.0
    %300 = vmatpush1.msra.mxu0 0.0
    %301 = vmatprep.subr.mxu0 0.0
    %302 = vmatpush1.msra.mxu0 0.0
    %303 = vmatprep.subr.mxu0 0.0
    %304 = vmatpush1.msra.mxu0 0.0
    %305 = vmatprep.subr.mxu0 0.0
    %306 = vmatpush1.msra.mxu0 0.0
    %307 = vmatprep.subr.mxu0 0.0
    %308 = vmatpush1.msra.mxu0 0.0
    %309 = vmatprep.subr.mxu0 0.0
    %310 = vmatpush1.msra.mxu0 0.0
    %311 = vmatprep.subr.mxu0 0.0
    %312 = vmatpush1.msra.mxu0 0.0
    %313 = vmatprep.mubr.f32.mxu0 0.0
    %v314 = vand.u32 %v90, 4294901760
    %v315 = vsub.f32 %v90, %v314
    %316 = vmatmul.mubr.f32.gmra.mrb[0].mxu0 %v315
    %v317 = vpop.f32.mrb[0].mxu0
    %v318 = vadd.f32 %v244, %v317
    %v319 = vpop.f32.mrb[0].mxu0
    %320 = vdwg.mxu0
    %321 = vmatprep.subr.mxu0 0.0
    %v322 = vand.u32 %v93, 4294901760
    %323 = vmatpush1.msra.mxu0 %v322
    %324 = vmatprep.subr.mxu0 0.0
    %325 = vmatpush1.msra.mxu0 0.0
    %326 = vmatprep.subr.mxu0 0.0
    %327 = vmatpush1.msra.mxu0 0.0
    %328 = vmatprep.subr.mxu0 0.0
    %329 = vmatpush1.msra.mxu0 0.0
    %330 = vmatprep.subr.mxu0 0.0
    %331 = vmatpush1.msra.mxu0 0.0
    %332 = vmatprep.subr.mxu0 0.0
    %333 = vmatpush1.msra.mxu0 0.0
    %334 = vmatprep.subr.mxu0 0.0
    %335 = vmatpush1.msra.mxu0 0.0
    %336 = vmatprep.subr.mxu0 0.0
    %337 = vmatpush1.msra.mxu0 0.0
    %338 = vmatprep.subr.mxu0 0.0
    %339 = vmatpush1.msra.mxu0 0.0
    %340 = vmatprep.subr.mxu0 0.0
    %341 = vmatpush1.msra.mxu0 0.0
    %342 = vmatprep.subr.mxu0 0.0
    %343 = vmatpush1.msra.mxu0 0.0
    %344 = vmatprep.subr.mxu0 0.0
    %345 = vmatpush1.msra.mxu0 0.0
    %346 = vmatprep.subr.mxu0 0.0
    %347 = vmatpush1.msra.mxu0 0.0
    %348 = vmatprep.subr.mxu0 0.0
    %349 = vmatpush1.msra.mxu0 0.0
    %350 = vmatprep.subr.mxu0 0.0
    %351 = vmatpush1.msra.mxu0 0.0
    %352 = vmatprep.subr.mxu0 0.0
    %353 = vmatpush1.msra.mxu0 0.0
    %354 = vmatprep.subr.mxu0 0.0
    %355 = vmatpush1.msra.mxu0 0.0
    %356 = vmatprep.subr.mxu0 0.0
    %357 = vmatpush1.msra.mxu0 0.0
    %358 = vmatprep.subr.mxu0 0.0
    %359 = vmatpush1.msra.mxu0 0.0
    %360 = vmatprep.subr.mxu0 0.0
    %361 = vmatpush1.msra.mxu0 0.0
    %362 = vmatprep.subr.mxu0 0.0
    %363 = vmatpush1.msra.mxu0 0.0
    %364 = vmatprep.subr.mxu0 0.0
    %365 = vmatpush1.msra.mxu0 0.0
    %366 = vmatprep.subr.mxu0 0.0
    %367 = vmatpush1.msra.mxu0 0.0
    %368 = vmatprep.subr.mxu0 0.0
    %369 = vmatpush1.msra.mxu0 0.0
    %370 = vmatprep.subr.mxu0 0.0
    %371 = vmatpush1.msra.mxu0 0.0
    %372 = vmatprep.subr.mxu0 0.0
    %373 = vmatpush1.msra.mxu0 0.0
    %374 = vmatprep.subr.mxu0 0.0
    %375 = vmatpush1.msra.mxu0 0.0
    %376 = vmatprep.subr.mxu0 0.0
    %377 = vmatpush1.msra.mxu0 0.0
    %378 = vmatprep.subr.mxu0 0.0
    %379 = vmatpush1.msra.mxu0 0.0
    %380 = vmatprep.subr.mxu0 0.0
    %381 = vmatpush1.msra.mxu0 0.0
    %382 = vmatprep.subr.mxu0 0.0
    %383 = vmatpush1.msra.mxu0 0.0
    %384 = vmatprep.subr.mxu0 0.0
    %385 = vmatpush1.msra.mxu0 0.0
    %386 = vmatprep.mubr.f32.mxu0 0.0
    %v387 = vand.u32 %v90, 4294901760
    %v388 = vsub.f32 %v90, %v387
    %v389 = vand.u32 %v388, 4294901760
    %390 = vmatmul.mubr.f32.gmra.mrb[0].mxu0 %v389
    %v391 = vpop.f32.mrb[0].mxu0
    %v392 = vadd.f32 %v318, %v391
    %v393 = vpop.f32.mrb[0].mxu0
    %394 = vdwg.mxu0
    %395 = vmatprep.subr.mxu0 0.0
    %v396 = vand.u32 %v93, 4294901760
    %v397 = vsub.f32 %v93, %v396
    %v398 = vand.u32 %v397, 4294901760
    %399 = vmatpush1.msra.mxu0 %v398
    %400 = vmatprep.subr.mxu0 0.0
    %401 = vmatpush1.msra.mxu0 0.0
    %402 = vmatprep.subr.mxu0 0.0
    %403 = vmatpush1.msra.mxu0 0.0
    %404 = vmatprep.subr.mxu0 0.0
    %405 = vmatpush1.msra.mxu0 0.0
    %406 = vmatprep.subr.mxu0 0.0
    %407 = vmatpush1.msra.mxu0 0.0
    %408 = vmatprep.subr.mxu0 0.0
    %409 = vmatpush1.msra.mxu0 0.0
    %410 = vmatprep.subr.mxu0 0.0
    %411 = vmatpush1.msra.mxu0 0.0
    %412 = vmatprep.subr.mxu0 0.0
    %413 = vmatpush1.msra.mxu0 0.0
    %414 = vmatprep.subr.mxu0 0.0
    %415 = vmatpush1.msra.mxu0 0.0
    %416 = vmatprep.subr.mxu0 0.0
    %417 = vmatpush1.msra.mxu0 0.0
    %418 = vmatprep.subr.mxu0 0.0
    %419 = vmatpush1.msra.mxu0 0.0
    %420 = vmatprep.subr.mxu0 0.0
    %421 = vmatpush1.msra.mxu0 0.0
    %422 = vmatprep.subr.mxu0 0.0
    %423 = vmatpush1.msra.mxu0 0.0
    %424 = vmatprep.subr.mxu0 0.0
    %425 = vmatpush1.msra.mxu0 0.0
    %426 = vmatprep.subr.mxu0 0.0
    %427 = vmatpush1.msra.mxu0 0.0
    %428 = vmatprep.subr.mxu0 0.0
    %429 = vmatpush1.msra.mxu0 0.0
    %430 = vmatprep.subr.mxu0 0.0
    %431 = vmatpush1.msra.mxu0 0.0
    %432 = vmatprep.subr.mxu0 0.0
    %433 = vmatpush1.msra.mxu0 0.0
    %434 = vmatprep.subr.mxu0 0.0
    %435 = vmatpush1.msra.mxu0 0.0
    %436 = vmatprep.subr.mxu0 0.0
    %437 = vmatpush1.msra.mxu0 0.0
    %438 = vmatprep.subr.mxu0 0.0
    %439 = vmatpush1.msra.mxu0 0.0
    %440 = vmatprep.subr.mxu0 0.0
    %441 = vmatpush1.msra.mxu0 0.0
    %442 = vmatprep.subr.mxu0 0.0
    %443 = vmatpush1.msra.mxu0 0.0
    %444 = vmatprep.subr.mxu0 0.0
    %445 = vmatpush1.msra.mxu0 0.0
    %446 = vmatprep.subr.mxu0 0.0
    %447 = vmatpush1.msra.mxu0 0.0
    %448 = vmatprep.subr.mxu0 0.0
    %449 = vmatpush1.msra.mxu0 0.0
    %450 = vmatprep.subr.mxu0 0.0
    %451 = vmatpush1.msra.mxu0 0.0
    %452 = vmatprep.subr.mxu0 0.0
    %453 = vmatpush1.msra.mxu0 0.0
    %454 = vmatprep.subr.mxu0 0.0
    %455 = vmatpush1.msra.mxu0 0.0
    %456 = vmatprep.subr.mxu0 0.0
    %457 = vmatpush1.msra.mxu0 0.0
    %458 = vmatprep.subr.mxu0 0.0
    %459 = vmatpush1.msra.mxu0 0.0
    %460 = vmatprep.subr.mxu0 0.0
    %461 = vmatpush1.msra.mxu0 0.0
    %462 = vmatprep.mubr.f32.mxu0 0.0
    %v463 = vand.u32 %v90, 4294901760
    %464 = vmatmul.mubr.f32.gmra.mrb[0].mxu0 %v463
    %v465 = vpop.f32.mrb[0].mxu0
    %v466 = vadd.f32 %v392, %v465
    %v467 = vpop.f32.mrb[0].mxu0
    %468 = vdwg.mxu0
    %469 = vmatprep.subr.mxu0 0.0
    %v470 = vand.u32 %v93, 4294901760
    %471 = vmatpush1.msra.mxu0 %v470
    %472 = vmatprep.subr.mxu0 0.0
    %473 = vmatpush1.msra.mxu0 0.0
    %474 = vmatprep.subr.mxu0 0.0
    %475 = vmatpush1.msra.mxu0 0.0
    %476 = vmatprep.subr.mxu0 0.0
    %477 = vmatpush1.msra.mxu0 0.0
    %478 = vmatprep.subr.mxu0 0.0
    %479 = vmatpush1.msra.mxu0 0.0
    %480 = vmatprep.subr.mxu0 0.0
    %481 = vmatpush1.msra.mxu0 0.0
    %482 = vmatprep.subr.mxu0 0.0
    %483 = vmatpush1.msra.mxu0 0.0
    %484 = vmatprep.subr.mxu0 0.0
    %485 = vmatpush1.msra.mxu0 0.0
    %486 = vmatprep.subr.mxu0 0.0
    %487 = vmatpush1.msra.mxu0 0.0
    %488 = vmatprep.subr.mxu0 0.0
    %489 = vmatpush1.msra.mxu0 0.0
    %490 = vmatprep.subr.mxu0 0.0
    %491 = vmatpush1.msra.mxu0 0.0
    %492 = vmatprep.subr.mxu0 0.0
    %493 = vmatpush1.msra.mxu0 0.0
    %494 = vmatprep.subr.mxu0 0.0
    %495 = vmatpush1.msra.mxu0 0.0
    %496 = vmatprep.subr.mxu0 0.0
    %497 = vmatpush1.msra.mxu0 0.0
    %498 = vmatprep.subr.mxu0 0.0
    %499 = vmatpush1.msra.mxu0 0.0
    %500 = vmatprep.subr.mxu0 0.0
    %501 = vmatpush1.msra.mxu0 0.0
    %502 = vmatprep.subr.mxu0 0.0
    %503 = vmatpush1.msra.mxu0 0.0
    %504 = vmatprep.subr.mxu0 0.0
    %505 = vmatpush1.msra.mxu0 0.0
    %506 = vmatprep.subr.mxu0 0.0
    %507 = vmatpush1.msra.mxu0 0.0
    %508 = vmatprep.subr.mxu0 0.0
    %509 = vmatpush1.msra.mxu0 0.0
    %510 = vmatprep.subr.mxu0 0.0
    %511 = vmatpush1.msra.mxu0 0.0
    %512 = vmatprep.subr.mxu0 0.0
    %513 = vmatpush1.msra.mxu0 0.0
    %514 = vmatprep.subr.mxu0 0.0
    %515 = vmatpush1.msra.mxu0 0.0
    %516 = vmatprep.subr.mxu0 0.0
    %517 = vmatpush1.msra.mxu0 0.0
    %518 = vmatprep.subr.mxu0 0.0
    %519 = vmatpush1.msra.mxu0 0.0
    %520 = vmatprep.subr.mxu0 0.0
    %521 = vmatpush1.msra.mxu0 0.0
    %522 = vmatprep.subr.mxu0 0.0
    %523 = vmatpush1.msra.mxu0 0.0
    %524 = vmatprep.subr.mxu0 0.0
    %525 = vmatpush1.msra.mxu0 0.0
    %526 = vmatprep.subr.mxu0 0.0
    %527 = vmatpush1.msra.mxu0 0.0
    %528 = vmatprep.subr.mxu0 0.0
    %529 = vmatpush1.msra.mxu0 0.0
    %530 = vmatprep.subr.mxu0 0.0
    %531 = vmatpush1.msra.mxu0 0.0
    %532 = vmatprep.subr.mxu0 0.0
    %533 = vmatpush1.msra.mxu0 0.0
    %534 = vmatprep.mubr.f32.mxu0 0.0
    %v535 = vand.u32 %v90, 4294901760
    %536 = vmatmul.mubr.f32.gmra.mrb[0].mxu0 %v535
    %v537 = vpop.f32.mrb[0].mxu0
    %v538 = vadd.f32 %v466, %v537
    %v539 = vpop.f32.mrb[0].mxu0
    %540 = vdwg.mxu0
    %v541 = vmax.f32 %v538, 0.0
    %v542 = vld [vmem:[#allocation7] sm:$0x1]
    %vm543 = vcmask 7168
    %v545 = vsel %vm543, %v541, 0
    %vm547 = vcmask 1040384
    %v549 = vsel %vm547, %v542, 0
    %551 = vmatprep.subr.mxu0 0.0
    %v552 = vand.u32 %v549, 4294901760
    %553 = vmatpush1.msra.mxu0 %v552
    %554 = vmatprep.subr.mxu0 0.0
    %555 = vmatpush1.msra.mxu0 0.0
    %556 = vmatprep.subr.mxu0 0.0
    %557 = vmatpush1.msra.mxu0 0.0
    %558 = vmatprep.subr.mxu0 0.0
    %559 = vmatpush1.msra.mxu0 0.0
    %560 = vmatprep.subr.mxu0 0.0
    %561 = vmatpush1.msra.mxu0 0.0
    %562 = vmatprep.subr.mxu0 0.0
    %563 = vmatpush1.msra.mxu0 0.0
    %564 = vmatprep.subr.mxu0 0.0
    %565 = vmatpush1.msra.mxu0 0.0
    %566 = vmatprep.subr.mxu0 0.0
    %567 = vmatpush1.msra.mxu0 0.0
    %568 = vmatprep.subr.mxu0 0.0
    %569 = vmatpush1.msra.mxu0 0.0
    %570 = vmatprep.subr.mxu0 0.0
    %571 = vmatpush1.msra.mxu0 0.0
    %572 = vmatprep.subr.mxu0 0.0
    %573 = vmatpush1.msra.mxu0 0.0
    %574 = vmatprep.subr.mxu0 0.0
    %575 = vmatpush1.msra.mxu0 0.0
    %576 = vmatprep.subr.mxu0 0.0
    %577 = vmatpush1.msra.mxu0 0.0
    %578 = vmatprep.subr.mxu0 0.0
    %579 = vmatpush1.msra.mxu0 0.0
    %580 = vmatprep.subr.mxu0 0.0
    %581 = vmatpush1.msra.mxu0 0.0
    %582 = vmatprep.subr.mxu0 0.0
    %583 = vmatpush1.msra.mxu0 0.0
    %584 = vmatprep.subr.mxu0 0.0
    %585 = vmatpush1.msra.mxu0 0.0
    %586 = vmatprep.subr.mxu0 0.0
    %587 = vmatpush1.msra.mxu0 0.0
    %588 = vmatprep.subr.mxu0 0.0
    %589 = vmatpush1.msra.mxu0 0.0
    %590 = vmatprep.subr.mxu0 0.0
    %591 = vmatpush1.msra.mxu0 0.0
    %592 = vmatprep.subr.mxu0 0.0
    %593 = vmatpush1.msra.mxu0 0.0
    %594 = vmatprep.subr.mxu0 0.0
    %595 = vmatpush1.msra.mxu0 0.0
    %596 = vmatprep.subr.mxu0 0.0
    %597 = vmatpush1.msra.mxu0 0.0
    %598 = vmatprep.subr.mxu0 0.0
    %599 = vmatpush1.msra.mxu0 0.0
    %600 = vmatprep.subr.mxu0 0.0
    %601 = vmatpush1.msra.mxu0 0.0
    %602 = vmatprep.subr.mxu0 0.0
    %603 = vmatpush1.msra.mxu0 0.0
    %604 = vmatprep.subr.mxu0 0.0
    %605 = vmatpush1.msra.mxu0 0.0
    %606 = vmatprep.subr.mxu0 0.0
    %607 = vmatpush1.msra.mxu0 0.0
    %608 = vmatprep.subr.mxu0 0.0
    %609 = vmatpush1.msra.mxu0 0.0
    %610 = vmatprep.subr.mxu0 0.0
    %611 = vmatpush1.msra.mxu0 0.0
    %612 = vmatprep.subr.mxu0 0.0
    %613 = vmatpush1.msra.mxu0 0.0
    %614 = vmatprep.subr.mxu0 0.0
    %615 = vmatpush1.msra.mxu0 0.0
    %616 = vmatprep.mubr.f32.mxu0 0.0
    %v617 = vand.u32 %v545, 4294901760
    %v618 = vsub.f32 %v545, %v617
    %v619 = vand.u32 %v618, 4294901760
    %v620 = vsub.f32 %v618, %v619
    %v621 = vand.u32 %v620, 4294901760
    %622 = vmatmul.mubr.f32.gmra.mrb[0].mxu0 %v621
    %v623 = vpop.f32.mrb[0].mxu0
    %v624 = vadd.f32 0.0, %v623
    %v625 = vpop.f32.mrb[0].mxu0
    %626 = vdwg.mxu0
    %627 = vmatprep.subr.mxu0 0.0
    %v628 = vand.u32 %v549, 4294901760
    %v629 = vsub.f32 %v549, %v628
    %v630 = vand.u32 %v629, 4294901760
    %v631 = vsub.f32 %v629, %v630
    %v632 = vand.u32 %v631, 4294901760
    %633 = vmatpush1.msra.mxu0 %v632
    %634 = vmatprep.subr.mxu0 0.0
    %635 = vmatpush1.msra.mxu0 0.0
    %636 = vmatprep.subr.mxu0 0.0
    %637 = vmatpush1.msra.mxu0 0.0
    %638 = vmatprep.subr.mxu0 0.0
    %639 = vmatpush1.msra.mxu0 0.0
    %640 = vmatprep.subr.mxu0 0.0
    %641 = vmatpush1.msra.mxu0 0.0
    %642 = vmatprep.subr.mxu0 0.0
    %643 = vmatpush1.msra.mxu0 0.0
    %644 = vmatprep.subr.mxu0 0.0
    %645 = vmatpush1.msra.mxu0 0.0
    %646 = vmatprep.subr.mxu0 0.0
    %647 = vmatpush1.msra.mxu0 0.0
    %648 = vmatprep.subr.mxu0 0.0
    %649 = vmatpush1.msra.mxu0 0.0
    %650 = vmatprep.subr.mxu0 0.0
    %651 = vmatpush1.msra.mxu0 0.0
    %652 = vmatprep.subr.mxu0 0.0
    %653 = vmatpush1.msra.mxu0 0.0
    %654 = vmatprep.subr.mxu0 0.0
    %655 = vmatpush1.msra.mxu0 0.0
    %656 = vmatprep.subr.mxu0 0.0
    %657 = vmatpush1.msra.mxu0 0.0
    %658 = vmatprep.subr.mxu0 0.0
    %659 = vmatpush1.msra.mxu0 0.0
    %660 = vmatprep.subr.mxu0 0.0
    %661 = vmatpush1.msra.mxu0 0.0
    %662 = vmatprep.subr.mxu0 0.0
    %663 = vmatpush1.msra.mxu0 0.0
    %664 = vmatprep.subr.mxu0 0.0
    %665 = vmatpush1.msra.mxu0 0.0
    %666 = vmatprep.subr.mxu0 0.0
    %667 = vmatpush1.msra.mxu0 0.0
    %668 = vmatprep.subr.mxu0 0.0
    %669 = vmatpush1.msra.mxu0 0.0
    %670 = vmatprep.subr.mxu0 0.0
    %671 = vmatpush1.msra.mxu0 0.0
    %672 = vmatprep.subr.mxu0 0.0
    %673 = vmatpush1.msra.mxu0 0.0
    %674 = vmatprep.subr.mxu0 0.0
    %675 = vmatpush1.msra.mxu0 0.0
    %676 = vmatprep.subr.mxu0 0.0
    %677 = vmatpush1.msra.mxu0 0.0
    %678 = vmatprep.subr.mxu0 0.0
    %679 = vmatpush1.msra.mxu0 0.0
    %680 = vmatprep.subr.mxu0 0.0
    %681 = vmatpush1.msra.mxu0 0.0
    %682 = vmatprep.subr.mxu0 0.0
    %683 = vmatpush1.msra.mxu0 0.0
    %684 = vmatprep.subr.mxu0 0.0
    %685 = vmatpush1.msra.mxu0 0.0
    %686 = vmatprep.subr.mxu0 0.0
    %687 = vmatpush1.msra.mxu0 0.0
    %688 = vmatprep.subr.mxu0 0.0
    %689 = vmatpush1.msra.mxu0 0.0
    %690 = vmatprep.subr.mxu0 0.0
    %691 = vmatpush1.msra.mxu0 0.0
    %692 = vmatprep.subr.mxu0 0.0
    %693 = vmatpush1.msra.mxu0 0.0
    %694 = vmatprep.subr.mxu0 0.0
    %695 = vmatpush1.msra.mxu0 0.0
    %696 = vmatprep.mubr.f32.mxu0 0.0
    %v697 = vand.u32 %v545, 4294901760
    %698 = vmatmul.mubr.f32.gmra.mrb[0].mxu0 %v697
    %v699 = vpop.f32.mrb[0].mxu0
    %v700 = vadd.f32 %v624, %v699
    %v701 = vpop.f32.mrb[0].mxu0
    %702 = vdwg.mxu0
    %703 = vmatprep.subr.mxu0 0.0
    %v704 = vand.u32 %v549, 4294901760
    %v705 = vsub.f32 %v549, %v704
    %706 = vmatpush1.msra.mxu0 %v705
    %707 = vmatprep.subr.mxu0 0.0
    %708 = vmatpush1.msra.mxu0 0.0
    %709 = vmatprep.subr.mxu0 0.0
    %710 = vmatpush1.msra.mxu0 0.0
    %711 = vmatprep.subr.mxu0 0.0
    %712 = vmatpush1.msra.mxu0 0.0
    %713 = vmatprep.subr.mxu0 0.0
    %714 = vmatpush1.msra.mxu0 0.0
    %715 = vmatprep.subr.mxu0 0.0
    %716 = vmatpush1.msra.mxu0 0.0
    %717 = vmatprep.subr.mxu0 0.0
    %718 = vmatpush1.msra.mxu0 0.0
    %719 = vmatprep.subr.mxu0 0.0
    %720 = vmatpush1.msra.mxu0 0.0
    %721 = vmatprep.subr.mxu0 0.0
    %722 = vmatpush1.msra.mxu0 0.0
    %723 = vmatprep.subr.mxu0 0.0
    %724 = vmatpush1.msra.mxu0 0.0
    %725 = vmatprep.subr.mxu0 0.0
    %726 = vmatpush1.msra.mxu0 0.0
    %727 = vmatprep.subr.mxu0 0.0
    %728 = vmatpush1.msra.mxu0 0.0
    %729 = vmatprep.subr.mxu0 0.0
    %730 = vmatpush1.msra.mxu0 0.0
    %731 = vmatprep.subr.mxu0 0.0
    %732 = vmatpush1.msra.mxu0 0.0
    %733 = vmatprep.subr.mxu0 0.0
    %734 = vmatpush1.msra.mxu0 0.0
    %735 = vmatprep.subr.mxu0 0.0
    %736 = vmatpush1.msra.mxu0 0.0
    %737 = vmatprep.subr.mxu0 0.0
    %738 = vmatpush1.msra.mxu0 0.0
    %739 = vmatprep.subr.mxu0 0.0
    %740 = vmatpush1.msra.mxu0 0.0
    %741 = vmatprep.subr.mxu0 0.0
    %742 = vmatpush1.msra.mxu0 0.0
    %743 = vmatprep.subr.mxu0 0.0
    %744 = vmatpush1.msra.mxu0 0.0
    %745 = vmatprep.subr.mxu0 0.0
    %746 = vmatpush1.msra.mxu0 0.0
    %747 = vmatprep.subr.mxu0 0.0
    %748 = vmatpush1.msra.mxu0 0.0
    %749 = vmatprep.subr.mxu0 0.0
    %750 = vmatpush1.msra.mxu0 0.0
    %751 = vmatprep.subr.mxu0 0.0
    %752 = vmatpush1.msra.mxu0 0.0
    %753 = vmatprep.subr.mxu0 0.0
    %754 = vmatpush1.msra.mxu0 0.0
    %755 = vmatprep.subr.mxu0 0.0
    %756 = vmatpush1.msra.mxu0 0.0
    %757 = vmatprep.subr.mxu0 0.0
    %758 = vmatpush1.msra.mxu0 0.0
    %759 = vmatprep.subr.mxu0 0.0
    %760 = vmatpush1.msra.mxu0 0.0
    %761 = vmatprep.subr.mxu0 0.0
    %762 = vmatpush1.msra.mxu0 0.0
    %763 = vmatprep.subr.mxu0 0.0
    %764 = vmatpush1.msra.mxu0 0.0
    %765 = vmatprep.subr.mxu0 0.0
    %766 = vmatpush1.msra.mxu0 0.0
    %767 = vmatprep.subr.mxu0 0.0
    %768 = vmatpush1.msra.mxu0 0.0
    %769 = vmatprep.mubr.f32.mxu0 0.0
    %v770 = vand.u32 %v545, 4294901760
    %v771 = vsub.f32 %v545, %v770
    %772 = vmatmul.mubr.f32.gmra.mrb[0].mxu0 %v771
    %v773 = vpop.f32.mrb[0].mxu0
    %v774 = vadd.f32 %v700, %v773
    %v775 = vpop.f32.mrb[0].mxu0
    %776 = vdwg.mxu0
    %777 = vmatprep.subr.mxu0 0.0
    %v778 = vand.u32 %v549, 4294901760
    %779 = vmatpush1.msra.mxu0 %v778
    %780 = vmatprep.subr.mxu0 0.0
    %781 = vmatpush1.msra.mxu0 0.0
    %782 = vmatprep.subr.mxu0 0.0
    %783 = vmatpush1.msra.mxu0 0.0
    %784 = vmatprep.subr.mxu0 0.0
    %785 = vmatpush1.msra.mxu0 0.0
    %786 = vmatprep.subr.mxu0 0.0
    %787 = vmatpush1.msra.mxu0 0.0
    %788 = vmatprep.subr.mxu0 0.0
    %789 = vmatpush1.msra.mxu0 0.0
    %790 = vmatprep.subr.mxu0 0.0
    %791 = vmatpush1.msra.mxu0 0.0
    %792 = vmatprep.subr.mxu0 0.0
    %793 = vmatpush1.msra.mxu0 0.0
    %794 = vmatprep.subr.mxu0 0.0
    %795 = vmatpush1.msra.mxu0 0.0
    %796 = vmatprep.subr.mxu0 0.0
    %797 = vmatpush1.msra.mxu0 0.0
    %798 = vmatprep.subr.mxu0 0.0
    %799 = vmatpush1.msra.mxu0 0.0
    %800 = vmatprep.subr.mxu0 0.0
    %801 = vmatpush1.msra.mxu0 0.0
    %802 = vmatprep.subr.mxu0 0.0
    %803 = vmatpush1.msra.mxu0 0.0
    %804 = vmatprep.subr.mxu0 0.0
    %805 = vmatpush1.msra.mxu0 0.0
    %806 = vmatprep.subr.mxu0 0.0
    %807 = vmatpush1.msra.mxu0 0.0
    %808 = vmatprep.subr.mxu0 0.0
    %809 = vmatpush1.msra.mxu0 0.0
    %810 = vmatprep.subr.mxu0 0.0
    %811 = vmatpush1.msra.mxu0 0.0
    %812 = vmatprep.subr.mxu0 0.0
    %813 = vmatpush1.msra.mxu0 0.0
    %814 = vmatprep.subr.mxu0 0.0
    %815 = vmatpush1.msra.mxu0 0.0
    %816 = vmatprep.subr.mxu0 0.0
    %817 = vmatpush1.msra.mxu0 0.0
    %818 = vmatprep.subr.mxu0 0.0
    %819 = vmatpush1.msra.mxu0 0.0
    %820 = vmatprep.subr.mxu0 0.0
    %821 = vmatpush1.msra.mxu0 0.0
    %822 = vmatprep.subr.mxu0 0.0
    %823 = vmatpush1.msra.mxu0 0.0
    %824 = vmatprep.subr.mxu0 0.0
    %825 = vmatpush1.msra.mxu0 0.0
    %826 = vmatprep.subr.mxu0 0.0
    %827 = vmatpush1.msra.mxu0 0.0
    %828 = vmatprep.subr.mxu0 0.0
    %829 = vmatpush1.msra.mxu0 0.0
    %830 = vmatprep.subr.mxu0 0.0
    %831 = vmatpush1.msra.mxu0 0.0
    %832 = vmatprep.subr.mxu0 0.0
    %833 = vmatpush1.msra.mxu0 0.0
    %834 = vmatprep.subr.mxu0 0.0
    %835 = vmatpush1.msra.mxu0 0.0
    %836 = vmatprep.subr.mxu0 0.0
    %837 = vmatpush1.msra.mxu0 0.0
    %838 = vmatprep.subr.mxu0 0.0
    %839 = vmatpush1.msra.mxu0 0.0
    %840 = vmatprep.subr.mxu0 0.0
    %841 = vmatpush1.msra.mxu0 0.0
    %842 = vmatprep.mubr.f32.mxu0 0.0
    %v843 = vand.u32 %v545, 4294901760
    %v844 = vsub.f32 %v545, %v843
    %v845 = vand.u32 %v844, 4294901760
    %846 = vmatmul.mubr.f32.gmra.mrb[0].mxu0 %v845
    %v847 = vpop.f32.mrb[0].mxu0
    %v848 = vadd.f32 %v774, %v847
    %v849 = vpop.f32.mrb[0].mxu0
    %850 = vdwg.mxu0
    %851 = vmatprep.subr.mxu0 0.0
    %v852 = vand.u32 %v549, 4294901760
    %v853 = vsub.f32 %v549, %v852
    %v854 = vand.u32 %v853, 4294901760
    %855 = vmatpush1.msra.mxu0 %v854
    %856 = vmatprep.subr.mxu0 0.0
    %857 = vmatpush1.msra.mxu0 0.0
    %858 = vmatprep.subr.mxu0 0.0
    %859 = vmatpush1.msra.mxu0 0.0
    %860 = vmatprep.subr.mxu0 0.0
    %861 = vmatpush1.msra.mxu0 0.0
    %862 = vmatprep.subr.mxu0 0.0
    %863 = vmatpush1.msra.mxu0 0.0
    %864 = vmatprep.subr.mxu0 0.0
    %865 = vmatpush1.msra.mxu0 0.0
    %866 = vmatprep.subr.mxu0 0.0
    %867 = vmatpush1.msra.mxu0 0.0
    %868 = vmatprep.subr.mxu0 0.0
    %869 = vmatpush1.msra.mxu0 0.0
    %870 = vmatprep.subr.mxu0 0.0
    %871 = vmatpush1.msra.mxu0 0.0
    %872 = vmatprep.subr.mxu0 0.0
    %873 = vmatpush1.msra.mxu0 0.0
    %874 = vmatprep.subr.mxu0 0.0
    %875 = vmatpush1.msra.mxu0 0.0
    %876 = vmatprep.subr.mxu0 0.0
    %877 = vmatpush1.msra.mxu0 0.0
    %878 = vmatprep.subr.mxu0 0.0
    %879 = vmatpush1.msra.mxu0 0.0
    %880 = vmatprep.subr.mxu0 0.0
    %881 = vmatpush1.msra.mxu0 0.0
    %882 = vmatprep.subr.mxu0 0.0
    %883 = vmatpush1.msra.mxu0 0.0
    %884 = vmatprep.subr.mxu0 0.0
    %885 = vmatpush1.msra.mxu0 0.0
    %886 = vmatprep.subr.mxu0 0.0
    %887 = vmatpush1.msra.mxu0 0.0
    %888 = vmatprep.subr.mxu0 0.0
    %889 = vmatpush1.msra.mxu0 0.0
    %890 = vmatprep.subr.mxu0 0.0
    %891 = vmatpush1.msra.mxu0 0.0
    %892 = vmatprep.subr.mxu0 0.0
    %893 = vmatpush1.msra.mxu0 0.0
    %894 = vmatprep.subr.mxu0 0.0
    %895 = vmatpush1.msra.mxu0 0.0
    %896 = vmatprep.subr.mxu0 0.0
    %897 = vmatpush1.msra.mxu0 0.0
    %898 = vmatprep.subr.mxu0 0.0
    %899 = vmatpush1.msra.mxu0 0.0
    %900 = vmatprep.subr.mxu0 0.0
    %901 = vmatpush1.msra.mxu0 0.0
    %902 = vmatprep.subr.mxu0 0.0
    %903 = vmatpush1.msra.mxu0 0.0
    %904 = vmatprep.subr.mxu0 0.0
    %905 = vmatpush1.msra.mxu0 0.0
    %906 = vmatprep.subr.mxu0 0.0
    %907 = vmatpush1.msra.mxu0 0.0
    %908 = vmatprep.subr.mxu0 0.0
    %909 = vmatpush1.msra.mxu0 0.0
    %910 = vmatprep.subr.mxu0 0.0
    %911 = vmatpush1.msra.mxu0 0.0
    %912 = vmatprep.subr.mxu0 0.0
    %913 = vmatpush1.msra.mxu0 0.0
    %914 = vmatprep.subr.mxu0 0.0
    %915 = vmatpush1.msra.mxu0 0.0
    %916 = vmatprep.subr.mxu0 0.0
    %917 = vmatpush1.msra.mxu0 0.0
    %918 = vmatprep.mubr.f32.mxu0 0.0
    %v919 = vand.u32 %v545, 4294901760
    %920 = vmatmul.mubr.f32.gmra.mrb[0].mxu0 %v919
    %v921 = vpop.f32.mrb[0].mxu0
    %v922 = vadd.f32 %v848, %v921
    %v923 = vpop.f32.mrb[0].mxu0
    %924 = vdwg.mxu0
    %925 = vmatprep.subr.mxu0 0.0
    %v926 = vand.u32 %v549, 4294901760
    %927 = vmatpush1.msra.mxu0 %v926
    %928 = vmatprep.subr.mxu0 0.0
    %929 = vmatpush1.msra.mxu0 0.0
    %930 = vmatprep.subr.mxu0 0.0
    %931 = vmatpush1.msra.mxu0 0.0
    %932 = vmatprep.subr.mxu0 0.0
    %933 = vmatpush1.msra.mxu0 0.0
    %934 = vmatprep.subr.mxu0 0.0
    %935 = vmatpush1.msra.mxu0 0.0
    %936 = vmatprep.subr.mxu0 0.0
    %937 = vmatpush1.msra.mxu0 0.0
    %938 = vmatprep.subr.mxu0 0.0
    %939 = vmatpush1.msra.mxu0 0.0
    %940 = vmatprep.subr.mxu0 0.0
    %941 = vmatpush1.msra.mxu0 0.0
    %942 = vmatprep.subr.mxu0 0.0
    %943 = vmatpush1.msra.mxu0 0.0
    %944 = vmatprep.subr.mxu0 0.0
    %945 = vmatpush1.msra.mxu0 0.0
    %946 = vmatprep.subr.mxu0 0.0
    %947 = vmatpush1.msra.mxu0 0.0
    %948 = vmatprep.subr.mxu0 0.0
    %949 = vmatpush1.msra.mxu0 0.0
    %950 = vmatprep.subr.mxu0 0.0
    %951 = vmatpush1.msra.mxu0 0.0
    %952 = vmatprep.subr.mxu0 0.0
    %953 = vmatpush1.msra.mxu0 0.0
    %954 = vmatprep.subr.mxu0 0.0
    %955 = vmatpush1.msra.mxu0 0.0
    %956 = vmatprep.subr.mxu0 0.0
    %957 = vmatpush1.msra.mxu0 0.0
    %958 = vmatprep.subr.mxu0 0.0
    %959 = vmatpush1.msra.mxu0 0.0
    %960 = vmatprep.subr.mxu0 0.0
    %961 = vmatpush1.msra.mxu0 0.0
    %962 = vmatprep.subr.mxu0 0.0
    %963 = vmatpush1.msra.mxu0 0.0
    %964 = vmatprep.subr.mxu0 0.0
    %965 = vmatpush1.msra.mxu0 0.0
    %966 = vmatprep.subr.mxu0 0.0
    %967 = vmatpush1.msra.mxu0 0.0
    %968 = vmatprep.subr.mxu0 0.0
    %969 = vmatpush1.msra.mxu0 0.0
    %970 = vmatprep.subr.mxu0 0.0
    %971 = vmatpush1.msra.mxu0 0.0
    %972 = vmatprep.subr.mxu0 0.0
    %973 = vmatpush1.msra.mxu0 0.0
    %974 = vmatprep.subr.mxu0 0.0
    %975 = vmatpush1.msra.mxu0 0.0
    %976 = vmatprep.subr.mxu0 0.0
    %977 = vmatpush1.msra.mxu0 0.0
    %978 = vmatprep.subr.mxu0 0.0
    %979 = vmatpush1.msra.mxu0 0.0
    %980 = vmatprep.subr.mxu0 0.0
    %981 = vmatpush1.msra.mxu0 0.0
    %982 = vmatprep.subr.mxu0 0.0
    %983 = vmatpush1.msra.mxu0 0.0
    %984 = vmatprep.subr.mxu0 0.0
    %985 = vmatpush1.msra.mxu0 0.0
    %986 = vmatprep.subr.mxu0 0.0
    %987 = vmatpush1.msra.mxu0 0.0
    %988 = vmatprep.subr.mxu0 0.0
    %989 = vmatpush1.msra.mxu0 0.0
    %990 = vmatprep.mubr.f32.mxu0 0.0
    %v991 = vand.u32 %v545, 4294901760
    %992 = vmatmul.mubr.f32.gmra.mrb[0].mxu0 %v991
    %v993 = vpop.f32.mrb[0].mxu0
    %v994 = vadd.f32 %v922, %v993
    %v995 = vpop.f32.mrb[0].mxu0
    %996 = vdwg.mxu0
    %v997 = vxor.u32 %v994, 2147483648
    %v998 = vmul.f32 %v997, 1.442695
    %v999 = vpow.pop %v998
    %v1000 = vadd.f32 %v999, 1.0
    %v1001 = vrcp.pop %v1000
    %v1002 = vmul.f32 1.0, %v1001
    %v1003 = vlaneseq
    %v1004 = vshrl.u32 %v1003, 7
    %v1005 = vsub.s32 0, %v1004
    %v1006 = vrot.slane %v1002, %v1005
    %1008 = vbcast.lane.b32.xlu0 %v1006, 256
    %v1009 = vpop.permute.xlu0 %1008
    %v1010 = vlaneseq
    %v1011 = vshrl.u32 %v1010, 7
    %v1012 = vsub.s32 1, %v1011
    %v1013 = vrot.slane %v1002, %v1012
    %1015 = vbcast.lane.b32.xlu0 %v1013, 256
    %v1016 = vpop.permute.xlu0 %1015
    %v1020 = vunpack.c.l.s4 839922192
    %v1021 = vunpack.c.0.s8 %v1020
    %v1022 = vlaneseq
    %v1023 = vshrl.u32 %v1022, 7
    %v1024 = vsub.s32 %v1021, %v1023
    %v1025 = vrot.slane %v1009, %v1024
    %v1027 = vunpack.c.l.s4 839922192
    %v1028 = vunpack.c.0.s8 %v1027
    %v1029 = vlaneseq
    %v1030 = vshrl.u32 %v1029, 7
    %v1031 = vsub.s32 %v1028, %v1030
    %v1032 = vrot.slane %v1016, %v1031
    %v1035 = vmul.f32 %v52, %v1025
    %v1036 = vmul.f32 %v53, %v1032
    %1037 = vst [vmem:[#allocation8] sm:$0xff] %v1035
    %1038 = vst [vmem:[#allocation8 + $0x8] sm:$0xff] %v1036
    // Predicated region
    $region26: #{tpu_custom_call.1} parent=1 // pred_check
      _
    $region27: #{tpu_custom_call.1} parent=1 // pred_check_branch
      %1040 = sbr.rel (0) target = $region29
    $region28: #{tpu_custom_call.1} parent=1 // pred_region
      %s1042 = ssub.s32 256, 256
      %1043 = vsyncadd [#allocation4], %s1042
      %s1044 = sshll.u32 [#allocation8], 4
      %s1045 = int_to_ptr.vmem [resolvable:$true] %s1044
      %1050 = dma.vmem_to_hbm [thread:$0]  %s1045, 256, %s3, [#allocation4], 128, 128, 8
    $region29: #{tpu_custom_call.1} parent=1 // pred_fallthru
      _
    // Predicated region
    $region30: #{tpu_custom_call.1} parent=1 // pred_check
      _
    $region31: #{tpu_custom_call.1} parent=1 // pred_check_branch
      %1052 = sbr.rel (0) target = $region33
    $region32: #{tpu_custom_call.1} parent=1 // pred_region
      %1053 = dma.done [#allocation4], 256
    $region33: #{tpu_custom_call.1} parent=1 // pred_fallthru
      _
    %1054 = vsyncpa [#allocation3], 1
    %1055 = vsyncpa [#allocation6], 1
    %1056 = vsyncpa [#allocation4], 1

</llo_original>
